<compile_context>
chip_gen: v6e
topology: v6e:2x2x1
jax: 0.10.0
libtpu: 0.0.40
codegen_flags: <defaults>
</compile_context>

<pallas_src>
import functools

import jax
import jax.numpy as jnp
from jax.experimental import pallas as pl
from jax.experimental.pallas import tpu as pltpu


def _netd_kernel(x_ref, w1_ref, b1_ref, w2_ref, b2_ref, o_ref, *, was):
    # --- layer 1: Linear(L -> K) on the MXU (bf16 operands, f32 accumulate) ---
    h = jnp.dot(x_ref[...], w1_ref[...],
                preferred_element_type=jnp.float32)      # [TILE_B, K] f32
    h = h + b1_ref[...]                                  # broadcast [1, K] (VPU)
    h = jnp.where(h > 0, h, 0.01 * h)                    # leaky_relu, slope 0.01

    # --- layer 2: Linear(K -> 1) as VPU multiply + lane reduce (skip N=1 MXU) ---
    out = jnp.sum(h * w2_ref[...], axis=-1, keepdims=True)   # [TILE_B, 1] f32
    out = out + b2_ref[0]                                    # scalar bias (SMEM)

    if not was:
        # sigmoid: exp + reciprocal both ride the EUP slot.
        out = pl.reciprocal(1.0 + jnp.exp(-out), approx=True)

    o_ref[...] = out.astype(o_ref.dtype)


def netd_forward(x, w1, b1, w2, b2, *, was=False, tile_b=512,
                 mxu_dtype=jnp.bfloat16):
    """x: [B, L], w1: [L, K], b1: [K], w2: [K, 1], b2: [1] -> [B, 1] float32."""
    B, L = x.shape
    K = w1.shape[1]
    assert w1.shape == (L, K) and w2.shape == (K, 1)
    assert b1.shape == (K,) and b2.shape == (1,)

    # Batch tile: >=512 rows when possible (amortizes per-step overhead and
    # reaches ~85% of HBM roofline), always a multiple of 8 sublanes.
    if B >= tile_b:
        TILE_B = tile_b
    else:
        TILE_B = max(8, ((B + 7) // 8) * 8)
    padded_B = ((B + TILE_B - 1) // TILE_B) * TILE_B

    # MXU operands in bf16 (halves x's HBM bytes; 2x MXU rate on v6e/v7x).
    # Post-matmul math stays f32 for v5e's f32-only VPU/EUP.
    x_in = x.astype(mxu_dtype)
    if padded_B != B:
        x_in = jnp.pad(x_in, ((0, padded_B - B), (0, 0)))
    w1_in = w1.astype(mxu_dtype)
    b1_2d = b1.reshape(1, K).astype(jnp.float32)
    w2_row = w2.reshape(1, K).astype(jnp.float32)   # row vector for the VPU mul
    b2_1d = b2.reshape(1).astype(jnp.float32)       # SMEM scalar

    kernel = functools.partial(_netd_kernel, was=was)

    out = pl.pallas_call(
        kernel,
        out_shape=jax.ShapeDtypeStruct((padded_B, 1), jnp.float32),
        grid=(padded_B // TILE_B,),
        in_specs=[
            pl.BlockSpec((TILE_B, L), lambda i: (i, 0)),         # x: batch-tiled
            pl.BlockSpec((L, K), lambda i: (0, 0)),              # w1: resident
            pl.BlockSpec((1, K), lambda i: (0, 0)),              # b1: resident
            pl.BlockSpec((1, K), lambda i: (0, 0)),              # w2 row: resident
            pl.BlockSpec(memory_space=pltpu.MemorySpace.SMEM),   # b2: scalar
        ],
        out_specs=pl.BlockSpec((TILE_B, 1), lambda i: (i, 0)),
        compiler_params=pltpu.CompilerParams(
            dimension_semantics=("parallel",),   # shard batch across v7x's 2 TCs
            vmem_limit_bytes=32 * 1024 * 1024,
        ),
    )(x_in, w1_in, b1_2d, w2_row, b2_1d)

    return out[:B] if padded_B != B else out


def _reference(x, w1, b1, w2, b2, was=False):
    h = x.astype(jnp.float32) @ w1.astype(jnp.float32) + b1
    h = jnp.where(h > 0, h, 0.01 * h)
    out = h @ w2 + b2
    if not was:
        out = jax.nn.sigmoid(out)
    return out


if __name__ == "__main__":
    # netD(L=32, K=64), batch=8 — small deterministic synthetic params.
    B, L, K = 8, 32, 64
    key = jax.random.PRNGKey(0)
    kx, k1, k2, k3, k4 = jax.random.split(key, 5)

    x = jax.random.normal(kx, (B, L), dtype=jnp.float32)

    # PyTorch Linear default init: U(-1/sqrt(fan_in), 1/sqrt(fan_in))
    bound1 = 1.0 / (L ** 0.5)
    w1 = jax.random.uniform(k1, (L, K), minval=-bound1, maxval=bound1,
                            dtype=jnp.float32)
    b1 = jax.random.uniform(k2, (K,), minval=-bound1, maxval=bound1,
                            dtype=jnp.float32)
    bound2 = 1.0 / (K ** 0.5)
    w2 = jax.random.uniform(k3, (K, 1), minval=-bound2, maxval=bound2,
                            dtype=jnp.float32)
    b2 = jax.random.uniform(k4, (1,), minval=-bound2, maxval=bound2,
                            dtype=jnp.float32)

    # Small-batch check (single grid step), was=False path.
    out = jax.block_until_ready(netd_forward(x, w1, b1, w2, b2, was=False))
    ref = _reference(x, w1, b1, w2, b2, was=False)
    assert out.shape == (B, 1)
    assert jnp.allclose(out, ref, atol=2e-2, rtol=2e-2)   # bf16 MXU tolerance

    # Larger ragged batch: exercises multi-step grid + padding, was=True path.
    B2 = 1030
    x2 = jax.random.normal(jax.random.PRNGKey(1), (B2, L), dtype=jnp.float32)
    out2 = jax.block_until_ready(netd_forward(x2, w1, b1, w2, b2, was=True))
    ref2 = _reference(x2, w1, b1, w2, b2, was=True)
    assert out2.shape == (B2, 1)
    assert jnp.allclose(out2, ref2, atol=2e-2, rtol=2e-2)

    print("KERNEL_OK")
</pallas_src>

<mosaic_0001>
module attributes {stable_mosaic.version = 11 : i64} {
  func.func @_netd_kernel(%arg0: i32, %arg1: memref<8x32xbf16, #tpu.memory_space<vmem>>, %arg2: memref<32x64xbf16, #tpu.memory_space<vmem>>, %arg3: memref<1x64xf32, #tpu.memory_space<vmem>>, %arg4: memref<1x64xf32, #tpu.memory_space<vmem>>, %arg5: memref<1xf32, #tpu.memory_space<smem>>, %arg6: memref<8x1xf32, #tpu.memory_space<vmem>>) attributes {dimension_semantics = [#tpu.dimension_semantics<parallel>], iteration_bounds = array<i64: 1>, scalar_prefetch = 0 : i64, scratch_operands = 0 : i64, tpu.core_type = #tpu.core_type<tc>, window_params = [{transform_indices = @transform_0, window_bounds = array<i64: 8, 32>}, {pipeline_mode = #tpu.pipeline_mode<synchronous>, transform_indices = @transform_1, window_bounds = array<i64: 32, 64>}, {pipeline_mode = #tpu.pipeline_mode<synchronous>, transform_indices = @transform_2, window_bounds = array<i64: 1, 64>}, {pipeline_mode = #tpu.pipeline_mode<synchronous>, transform_indices = @transform_3, window_bounds = array<i64: 1, 64>}, {transform_indices = @transform_4, window_bounds = array<i64: 1>}, {transform_indices = @transform_5, window_bounds = array<i64: 8, 1>}]} {
    %c0 = arith.constant 0 : index
    %c0_0 = arith.constant 0 : index
    %0 = vector.load %arg1[%c0, %c0_0] : memref<8x32xbf16, #tpu.memory_space<vmem>>, vector<8x32xbf16>
    %c0_1 = arith.constant 0 : index
    %c0_2 = arith.constant 0 : index
    %1 = vector.load %arg2[%c0_1, %c0_2] : memref<32x64xbf16, #tpu.memory_space<vmem>>, vector<32x64xbf16>
    %cst = arith.constant dense<0.000000e+00> : vector<8x64xf32>
    %2 = tpu.matmul %0, %1, %cst {dimension_numbers = #tpu.dot_dimension_numbers<[1], [0], [0], [1], [0, 0, 1, 1], [], []>} : vector<8x32xbf16>, vector<32x64xbf16>, vector<8x64xf32> -> vector<8x64xf32>
    %c0_3 = arith.constant 0 : index
    %c0_4 = arith.constant 0 : index
    %3 = vector.load %arg3[%c0_3, %c0_4] : memref<1x64xf32, #tpu.memory_space<vmem>>, vector<1x64xf32>
    %4 = vector.broadcast %3 : vector<1x64xf32> to vector<8x64xf32>
    %5 = arith.addf %2, %4 : vector<8x64xf32>
    %cst_5 = arith.constant 0.000000e+00 : f32
    %6 = vector.broadcast %cst_5 : f32 to vector<8x64xf32>
    %7 = arith.cmpf ogt, %5, %6 : vector<8x64xf32>
    %cst_6 = arith.constant 0.00999999977 : f32
    %8 = vector.broadcast %cst_6 : f32 to vector<8x64xf32>
    %9 = arith.mulf %8, %5 : vector<8x64xf32>
    %10 = arith.select %7, %5, %9 : vector<8x64xi1>, vector<8x64xf32>
    %c0_7 = arith.constant 0 : index
    %c0_8 = arith.constant 0 : index
    %11 = vector.load %arg4[%c0_7, %c0_8] : memref<1x64xf32, #tpu.memory_space<vmem>>, vector<1x64xf32>
    %12 = vector.broadcast %11 : vector<1x64xf32> to vector<8x64xf32>
    %13 = arith.mulf %10, %12 : vector<8x64xf32>
    %cst_9 = arith.constant dense<0.000000e+00> : vector<8xf32>
    %14 = vector.multi_reduction <add>, %13, %cst_9 [1] : vector<8x64xf32> to vector<8xf32>
    %15 = vector.shape_cast %14 : vector<8xf32> to vector<8x1xf32>
    %c0_10 = arith.constant 0 : index
    %16 = memref.load %arg5[%c0_10] : memref<1xf32, #tpu.memory_space<smem>>
    %17 = vector.broadcast %16 : f32 to vector<8x1xf32>
    %18 = arith.addf %15, %17 : vector<8x1xf32>
    %cst_11 = arith.constant 0.000000e+00 : f32
    %19 = vector.broadcast %cst_11 : f32 to vector<8x1xf32>
    %20 = arith.subf %19, %18 : vector<8x1xf32>
    %21 = math.exp %20 : vector<8x1xf32>
    %cst_12 = arith.constant 1.000000e+00 : f32
    %22 = vector.broadcast %cst_12 : f32 to vector<8x1xf32>
    %23 = arith.addf %22, %21 : vector<8x1xf32>
    %24 = tpu.reciprocal %23 {approx = true} : vector<8x1xf32> -> vector<8x1xf32>
    %c0_13 = arith.constant 0 : index
    %c0_14 = arith.constant 0 : index
    %25 = vector.load %arg6[%c0_13, %c0_14] : memref<8x1xf32, #tpu.memory_space<vmem>>, vector<8x1xf32>
    tpu.vector_store %arg6[%c0_13, %c0_14], %24 {strides = array<i32>} : memref<8x1xf32, #tpu.memory_space<vmem>>, vector<8x1xf32>,
    return
  }
  func.func @transform_0(%arg0: i32) -> (i32, i32) {
    %c0_i32 = arith.constant 0 : i32
    %c0_i32_0 = arith.constant 0 : i32
    return %arg0, %c0_i32 : i32, i32
  }
  func.func @transform_1(%arg0: i32) -> (i32, i32) {
    %c0_i32 = arith.constant 0 : i32
    %c0_i32_0 = arith.constant 0 : i32
    %c0_i32_1 = arith.constant 0 : i32
    return %c0_i32, %c0_i32_0 : i32, i32
  }
  func.func @transform_2(%arg0: i32) -> (i32, i32) {
    %c0_i32 = arith.constant 0 : i32
    %c0_i32_0 = arith.constant 0 : i32
    %c0_i32_1 = arith.constant 0 : i32
    return %c0_i32, %c0_i32_0 : i32, i32
  }
  func.func @transform_3(%arg0: i32) -> (i32, i32) {
    %c0_i32 = arith.constant 0 : i32
    %c0_i32_0 = arith.constant 0 : i32
    %c0_i32_1 = arith.constant 0 : i32
    return %c0_i32, %c0_i32_0 : i32, i32
  }
  func.func @transform_4(%arg0: i32) -> i32 {
    %c0_i32 = arith.constant 0 : i32
    %c0_i32_0 = arith.constant 0 : i32
    return %c0_i32 : i32
  }
  func.func @transform_5(%arg0: i32) -> (i32, i32) {
    %c0_i32 = arith.constant 0 : i32
    %c0_i32_0 = arith.constant 0 : i32
    return %arg0, %c0_i32 : i32, i32
  }
}

</mosaic_0001>

<llo_original>
// kernel: tpu_custom_call.1
$region0: #{tpu_custom_call.1}
  #allocation0 [shape = 'u32[]', space=smem, size = 0x4, offset = 0x4, fixed_abs, tag = 'smem constant byte address 0x4 - core index']
  #allocation1 [shape = 'u32[144,128]{1,0:T(1,128)}', space=vmem, size = 0x12000, scoped, tag = 'internal scratch']
  #allocation2 [shape = 'f32[1]{0:T(128)S(6)}', space=smem, size = 0x200, scoped, tag = 'scoped memory for tpu_custom_call.1']
  %s0 = inlined_call_operand.hbm [shape: bf16[8,32], index: 0, kind: input, shape index: {}]
  %s1 = inlined_call_operand.hbm [shape: bf16[32,64], index: 1, kind: input, shape index: {}]
  %s2 = inlined_call_operand.vmem [shape: f32[1,64], index: 2, kind: input, shape index: {}]
  %s3 = inlined_call_operand.vmem [shape: f32[1,64], index: 3, kind: input, shape index: {}]
  %s4 = inlined_call_operand.<no memory space> [shape: f32[1], index: 4, kind: input, shape index: {}]
  %s5 = inlined_call_operand.vmem [shape: f32[8,1], index: 5, kind: output, shape index: {}]
  %s6 = sld [smem:[#allocation0]]
  $region38: #{tpu_custom_call.1} parent=0
    _
  %s8 = ssub.s32 1, %s6
  %s9 = scalar_select 0, %s8, %s6
  %10 = sst [smem:[#allocation2]] %s4
  $region1: #{tpu_custom_call.1} parent=0
    #allocation3 [shape = 'u8[2048]{0}', space=vmem, size = 0x800, scoped, tag = 'input window, operand 0, single buffered']
    #allocation4 [shape = 's32[1]{0}', space=sflag, size = 0x4, scoped, tag = 'scoped memory for tpu_custom_call.1']
    #allocation5 [shape = 'u8[8192]{0}', space=vmem, size = 0x2000, scoped, tag = 'input window, operand 1, single buffered']
    #allocation6 [shape = 's32[1]{0}', space=sflag, size = 0x4, scoped, tag = 'scoped memory for tpu_custom_call.1']
    %11 = vsyncpa [#allocation4], 0
    %12 = vsyncpa [#allocation6], 0
    // Predicated region
    $region2: #{tpu_custom_call.1} parent=1 // pred_check
      _
    $region3: #{tpu_custom_call.1} parent=1 // pred_check_branch
      %14 = sbr.rel (0) target = $region5
    $region4: #{tpu_custom_call.1} parent=1 // pred_region
      %s16 = ssub.s32 64, 64
      %17 = vsyncadd [#allocation4], %s16
      %s19 = sshll.u32 [#allocation3], 4
      %s20 = int_to_ptr.vmem [resolvable:$true] %s19
      %22 = dma.hbm_to_vmem [thread:$0]  %s0, 64, %s20, [#allocation4]
    $region5: #{tpu_custom_call.1} parent=1 // pred_fallthru
      _
    // Predicated region
    $region6: #{tpu_custom_call.1} parent=1 // pred_check
      _
    $region7: #{tpu_custom_call.1} parent=1 // pred_check_branch
      %24 = sbr.rel (0) target = $region9
    $region8: #{tpu_custom_call.1} parent=1 // pred_region
      %s26 = ssub.s32 256, 256
      %27 = vsyncadd [#allocation6], %s26
      %s28 = sshll.u32 [#allocation5], 4
      %s29 = int_to_ptr.vmem [resolvable:$true] %s28
      %34 = dma.hbm_to_vmem [thread:$0]  %s1, 256, %s29, [#allocation6], 64, 64, 4
    $region9: #{tpu_custom_call.1} parent=1 // pred_fallthru
      _
    // Predicated region
    $region10: #{tpu_custom_call.1} parent=1 // pred_check
      _
    $region11: #{tpu_custom_call.1} parent=1 // pred_check_branch
      %36 = sbr.rel (0) target = $region13
    $region12: #{tpu_custom_call.1} parent=1 // pred_region
      _
    $region13: #{tpu_custom_call.1} parent=1 // pred_fallthru
      _
    // Predicated region
    $region14: #{tpu_custom_call.1} parent=1 // pred_check
      _
    $region15: #{tpu_custom_call.1} parent=1 // pred_check_branch
      %38 = sbr.rel (0) target = $region17
    $region16: #{tpu_custom_call.1} parent=1 // pred_region
      _
    $region17: #{tpu_custom_call.1} parent=1 // pred_fallthru
      _
    // Predicated region
    $region18: #{tpu_custom_call.1} parent=1 // pred_check
      _
    $region19: #{tpu_custom_call.1} parent=1 // pred_check_branch
      %40 = sbr.rel (0) target = $region21
    $region20: #{tpu_custom_call.1} parent=1 // pred_region
      _
    $region21: #{tpu_custom_call.1} parent=1 // pred_fallthru
      _
    // Predicated region
    $region22: #{tpu_custom_call.1} parent=1 // pred_check
      _
    $region23: #{tpu_custom_call.1} parent=1 // pred_check_branch
      %42 = sbr.rel (0) target = $region25
    $region24: #{tpu_custom_call.1} parent=1 // pred_region
      %43 = dma.done [#allocation4], 64
    $region25: #{tpu_custom_call.1} parent=1 // pred_fallthru
      _
    // Predicated region
    $region26: #{tpu_custom_call.1} parent=1 // pred_check
      _
    $region27: #{tpu_custom_call.1} parent=1 // pred_check_branch
      %45 = sbr.rel (0) target = $region29
    $region28: #{tpu_custom_call.1} parent=1 // pred_region
      %46 = dma.done [#allocation6], 256
    $region29: #{tpu_custom_call.1} parent=1 // pred_fallthru
      _
    %v48 = vld [vmem:[#allocation3] sm:$0xf]
    %v49 = vld [vmem:[#allocation5] sm:$0xf]
    %v50 = vld [vmem:[#allocation5 + $0x4] sm:$0xf]
    %v51 = vld [vmem:[#allocation5 + $0x8] sm:$0xf]
    %v52 = vld [vmem:[#allocation5 + $0xc] sm:$0xf]
    %v53 = vld [vmem:[%s2] sm:$0x1]
    %v55 = vlaneseq
    %v56 = vshrl.u32 %v55, 7
    %v57 = vsub.s32 0, %v56
    %v58 = vrot.slane %v53, %v57
    %v64 = vunpack.c.l.b16 %v49
    %v65 = vunpack.c.l.b16 %v50
    %v66 = vunpack.c.l.b16 %v51
    %v67 = vunpack.c.l.b16 %v52
    %v68 = vpack.c.b16 %v65, %v64
    %v69 = vpack.c.b16 %v67, %v66
    %vm72 = vcmask 261120
    %v74 = vsel %vm72, %v48, 0
    %76 = vmatprep.subr.bf16.mxu0 0
    %77 = vmatpush1.bf16.msra.mxu0 0
    %78 = vmatprep.subr.bf16.mxu0 0
    %79 = vmatpush1.bf16.msra.mxu0 0
    %80 = vmatprep.subr.bf16.mxu0 0
    %81 = vmatpush1.bf16.msra.mxu0 0
    %82 = vmatprep.subr.bf16.mxu0 0
    %83 = vmatpush1.bf16.msra.mxu0 0
    %84 = vmatprep.subr.bf16.mxu0 0
    %85 = vmatpush1.bf16.msra.mxu0 0
    %86 = vmatprep.subr.bf16.mxu0 0
    %87 = vmatpush1.bf16.msra.mxu0 0
    %88 = vmatprep.subr.bf16.mxu0 0
    %89 = vmatpush1.bf16.msra.mxu0 %v69
    %90 = vmatprep.subr.bf16.mxu0 0
    %91 = vmatpush1.bf16.msra.mxu0 %v68
    %92 = vmatprep.subr.bf16.mxu0 0
    %93 = vmatpush2.bf16.msra.mxu0 0
    %94 = vmatprep.subr.bf16.mxu0 0
    %95 = vmatpush2.bf16.msra.mxu0 0
    %96 = vmatprep.subr.bf16.mxu0 0
    %97 = vmatpush2.bf16.msra.mxu0 0
    %98 = vmatprep.subr.bf16.mxu0 0
    %99 = vmatpush2.bf16.msra.mxu0 0
    %100 = vmatprep.subr.bf16.mxu0 0
    %101 = vmatpush2.bf16.msra.mxu0 0
    %102 = vmatprep.subr.bf16.mxu0 0
    %103 = vmatpush2.bf16.msra.mxu0 0
    %104 = vmatprep.subr.bf16.mxu0 0
    %105 = vmatpush2.bf16.msra.mxu0 0
    %106 = vmatprep.subr.bf16.mxu0 0
    %107 = vmatpush2.bf16.msra.mxu0 0
    %108 = vmatprep.mubr.bf16.mxu0 0
    %109 = vmatmul.mubr.bf16.gmra.mxu0 %v74
    %v110 = vpop.f32.mrf.mxu0
    %v111 = vadd.f32 %v58, %v110
    %v112 = vpop.f32.mrf.mxu0
    %v113 = vpop.f32.mrf.mxu0
    %v114 = vpop.f32.mrf.mxu0
    %115 = vdwg.mxu0
    %vm116 = vcmp.gt.f32.partialorder %v111, 0.0
    %v117 = vmul.f32 %v111, 0.01
    %v118 = vsel %vm116, %v111, %v117
    %v119 = vld [vmem:[%s3] sm:$0x1]
    %v121 = vlaneseq
    %v122 = vshrl.u32 %v121, 7
    %v123 = vsub.s32 0, %v122
    %v124 = vrot.slane %v119, %v123
    %v126 = vmul.f32 %v118, %v124
    %vm127 = vcmask 523264
    %v128 = vsel %vm127, %v126, 0.0
    %129 = vadd.xlane.f32.xlu0 %v128
    %v130 = vpop.xlane.xlu0 %129
    %s131 = sld [smem:[#allocation2]]
    %v132 = vstv %s131
    %v133 = vadd.f32 %v130, %v132
    %v134 = vsub.f32 0.0, %v133
    %v135 = vmul.f32 %v134, 1.442695
    %v136 = vpow.pop %v135
    %v137 = vadd.f32 %v136, 1.0
    %v138 = vrcp.pop %v137
    %vm139 = vcmask 7168
    %140 = vst.msk [vmem:[%s5] sm:$0xff] %vm139, %v138
    // Predicated region
    $region30: #{tpu_custom_call.1} parent=1 // pred_check
      _
    $region31: #{tpu_custom_call.1} parent=1 // pred_check_branch
      %142 = sbr.rel (0) target = $region33
    $region32: #{tpu_custom_call.1} parent=1 // pred_region
      _
    $region33: #{tpu_custom_call.1} parent=1 // pred_fallthru
      _
    // Predicated region
    $region34: #{tpu_custom_call.1} parent=1 // pred_check
      _
    $region35: #{tpu_custom_call.1} parent=1 // pred_check_branch
      %144 = sbr.rel (0) target = $region37
    $region36: #{tpu_custom_call.1} parent=1 // pred_region
      _
    $region37: #{tpu_custom_call.1} parent=1 // pred_fallthru
      _
    %145 = vsyncpa [#allocation4], 1
    %146 = vsyncpa [#allocation6], 1

</llo_original>
